<compile_context>
chip_gen: v7x
topology: tpu7x:2x2x1
jax: 0.10.0
libtpu: 0.0.40
codegen_flags: <defaults>
</compile_context>

<pallas_src>
import functools

import jax
import jax.numpy as jnp
from jax.experimental import pallas as pl
from jax.experimental.pallas import tpu as pltpu

_EPS = 1e-5


def _round_up(x, m):
    return ((x + m - 1) // m) * m


def _pick_tn(n_pad):
    for t in (512, 256, 128):
        if n_pad % t == 0:
            return t
    return 128


def _pick_tk(k_pad):
    # Whole-K when it fits comfortably in VMEM -> no K grid axis at all.
    if k_pad <= 2048:
        return k_pad
    for t in (2048, 1024, 512, 256, 128):
        if k_pad % t == 0:
            return t
    return 128


def _tm_and_mpad(m):
    m_pad = _round_up(m, 8)
    for t in (512, 256, 128, 64, 32, 16, 8):
        if m_pad % t == 0:
            return t, m_pad
    return 8, m_pad


def _compiler_params(sem, est_bytes):
    kwargs = dict(dimension_semantics=sem)
    if est_bytes > 24 * 1024 * 1024:
        # Raise scoped VMEM only when needed; cap below v7x's 64 MiB physical.
        kwargs["vmem_limit_bytes"] = min(
            _round_up(int(est_bytes * 1.25), 1 << 20), 56 * 1024 * 1024)
    return pltpu.CompilerParams(**kwargs)


# --------------------------------------------------------------------- kernels
def _mm_kernel(x_ref, w_ref, sb_ref, *rest, apply_relu, has_residual, multi_k):
    """Tiled matmul, fused BN affine (+ residual) (+ ReLU).

    sb_ref is packed (2, tn): row 0 = scale, row 1 = bias.
    When multi_k is False the grid has no K axis: no scratch, direct store.
    """
    idx = 0
    res_ref = None
    if has_residual:
        res_ref = rest[idx]
        idx += 1
    o_ref = rest[idx]
    idx += 1
    acc_ref = rest[idx] if multi_k else None

    def finish(acc):
        out = acc * sb_ref[0:1, :] + sb_ref[1:2, :]
        if has_residual:
            out = out + res_ref[...].astype(jnp.float32)
        if apply_relu:
            out = jnp.maximum(out, 0.0)
        o_ref[...] = out.astype(o_ref.dtype)

    if multi_k:
        @pl.when(pl.program_id(2) == 0)
        def _():
            acc_ref[...] = jnp.zeros_like(acc_ref)

        acc_ref[...] += jnp.dot(x_ref[...], w_ref[...],
                                preferred_element_type=jnp.float32)

        @pl.when(pl.program_id(2) == pl.num_programs(2) - 1)
        def _():
            finish(acc_ref[...])
    else:
        finish(jnp.dot(x_ref[...], w_ref[...],
                       preferred_element_type=jnp.float32))


def _conv3x3_kernel(x_ref, w_ref, sb_ref, o_ref, *, apply_relu, ho, wo):
    """Direct 3x3 / stride-1 conv (no im2col slab).

    x_ref: (1, H+2, W+2, Cin_pad) whole padded image for one batch element,
    w_ref: (9, Cin_pad, tn), sb_ref: (2, tn), o_ref: (1, H, W, tn).
    The kh*kw window is accumulated in-register per output row.
    """
    scale = sb_ref[0:1, :]
    bias = sb_ref[1:2, :]

    def row(oh):
        acc = None
        for widx in range(9):
            di, dj = divmod(widx, 3)
            win = x_ref[0, oh + di, pl.ds(dj, wo), :]          # (wo, Cin_pad)
            part = jnp.dot(win, w_ref[widx],
                           preferred_element_type=jnp.float32)  # (wo, tn)
            acc = part if acc is None else acc + part
        out = acc * scale + bias
        if apply_relu:
            out = jnp.maximum(out, 0.0)
        return out.astype(o_ref.dtype)

    if ho <= 16:
        for oh in range(ho):
            o_ref[0, oh] = row(oh)
    else:
        def body(oh, carry):
            o_ref[0, oh] = row(oh)
            return carry

        jax.lax.fori_loop(0, ho, body, 0)


def _maxpool_kernel(p_ref, o_ref):
    # p_ref: (9, tm, C) shifted window slabs -> elementwise max over windows.
    acc = p_ref[0]
    for w in range(1, 9):
        acc = jnp.maximum(acc, p_ref[w])
    o_ref[...] = acc


def _gap_fc_kernel(x_ref, w_ref, b_ref, o_ref):
    # Fused global-average-pool + FC:  o = mean(x, spatial) @ W + b
    feats = jnp.mean(x_ref[...].astype(jnp.float32), axis=1)      # (B, 2048)
    o_ref[...] = (jnp.dot(feats.astype(jnp.bfloat16), w_ref[...],
                          preferred_element_type=jnp.float32) + b_ref[...])


# ------------------------------------------------- cached pallas_call factories
_MM_CACHE = {}
_DCONV_CACHE = {}
_MAXPOOL_CACHE = {}
_GAPFC_CACHE = {}


def _mm_call(m_pad, k_pad, n_pad, tm, tn, tk, apply_relu, has_res, out_dtype):
    key = (m_pad, k_pad, n_pad, tm, tn, tk, apply_relu, has_res, out_dtype)
    if key in _MM_CACHE:
        return _MM_CACHE[key]

    nk = k_pad // tk
    multi_k = nk > 1
    kernel = functools.partial(_mm_kernel, apply_relu=apply_relu,
                               has_residual=has_res, multi_k=multi_k)
    if multi_k:
        grid = (m_pad // tm, n_pad // tn, nk)
        in_specs = [
            pl.BlockSpec((tm, tk), lambda i, j, k: (i, k)),
            pl.BlockSpec((tk, tn), lambda i, j, k: (k, j)),
            pl.BlockSpec((2, tn), lambda i, j, k: (0, j)),
        ]
        if has_res:
            in_specs.append(pl.BlockSpec((tm, tn), lambda i, j, k: (i, j)))
        out_specs = pl.BlockSpec((tm, tn), lambda i, j, k: (i, j))
        scratch = [pltpu.VMEM((tm, tn), jnp.float32)]
        sem = ("parallel", "parallel", "arbitrary")
    else:
        grid = (m_pad // tm, n_pad // tn)
        in_specs = [
            pl.BlockSpec((tm, tk), lambda i, j: (i, 0)),
            pl.BlockSpec((tk, tn), lambda i, j: (0, j)),
            pl.BlockSpec((2, tn), lambda i, j: (0, j)),
        ]
        if has_res:
            in_specs.append(pl.BlockSpec((tm, tn), lambda i, j: (i, j)))
        out_specs = pl.BlockSpec((tm, tn), lambda i, j: (i, j))
        scratch = []
        sem = ("parallel", "parallel")

    out_bytes = 2 if out_dtype == jnp.bfloat16 else 4
    est = 2 * (tm * tk * 2 + tk * tn * 2 + 2 * tn * 4 + tm * tn * out_bytes)
    if has_res:
        est += 2 * tm * tn * 2
    if multi_k:
        est += tm * tn * 4
    bytes_accessed = (2 * (m_pad * k_pad + k_pad * n_pad) + 8 * n_pad
                      + m_pad * n_pad * out_bytes
                      + (2 * m_pad * n_pad if has_res else 0))

    _MM_CACHE[key] = jax.jit(pl.pallas_call(
        kernel,
        out_shape=jax.ShapeDtypeStruct((m_pad, n_pad), out_dtype),
        grid=grid,
        in_specs=in_specs,
        out_specs=out_specs,
        scratch_shapes=scratch,
        compiler_params=_compiler_params(sem, est),
        cost_estimate=pl.CostEstimate(flops=2 * m_pad * n_pad * k_pad,
                                      transcendentals=0,
                                      bytes_accessed=bytes_accessed),
    ))
    return _MM_CACHE[key]


def matmul_bn_act(x2d, w_p, sb_p, apply_relu, residual=None,
                  out_dtype=jnp.bfloat16):
    """act((x @ w) * scale + bias (+ residual)); channels stay padded."""
    m, k = x2d.shape
    k_pad, n_pad = w_p.shape
    tm, m_pad = _tm_and_mpad(m)
    tn = _pick_tn(n_pad)
    tk = _pick_tk(k_pad)

    x_p = x2d.astype(jnp.bfloat16)
    if (m_pad, k_pad) != (m, k):
        x_p = jnp.pad(x_p, ((0, m_pad - m), (0, k_pad - k)))

    has_res = residual is not None
    args = [x_p, w_p, sb_p]
    if has_res:
        res_p = residual.astype(jnp.bfloat16)
        if res_p.shape != (m_pad, n_pad):
            res_p = jnp.pad(res_p, ((0, m_pad - res_p.shape[0]),
                                    (0, n_pad - res_p.shape[1])))
        args.append(res_p)

    call = _mm_call(m_pad, k_pad, n_pad, tm, tn, tk, apply_relu, has_res,
                    out_dtype)
    out = call(*args)
    return out[:m] if m_pad != m else out


def _dconv_call(b, h, w, c_pad, n_pad, apply_relu):
    key = (b, h, w, c_pad, n_pad, apply_relu)
    if key in _DCONV_CACHE:
        return _DCONV_CACHE[key]
    tn = _pick_tn(n_pad)
    hp, wp = h + 2, w + 2
    kernel = functools.partial(_conv3x3_kernel, apply_relu=apply_relu,
                               ho=h, wo=w)
    est = 2 * (hp * wp * c_pad * 2 + 9 * c_pad * tn * 2 + 2 * tn * 4
               + h * w * tn * 2)
    _DCONV_CACHE[key] = jax.jit(pl.pallas_call(
        kernel,
        out_shape=jax.ShapeDtypeStruct((b, h, w, n_pad), jnp.bfloat16),
        grid=(b, n_pad // tn),
        in_specs=[
            pl.BlockSpec((1, hp, wp, c_pad), lambda bi, j: (bi, 0, 0, 0)),
            pl.BlockSpec((9, c_pad, tn), lambda bi, j: (0, 0, j)),
            pl.BlockSpec((2, tn), lambda bi, j: (0, j)),
        ],
        out_specs=pl.BlockSpec((1, h, w, tn), lambda bi, j: (bi, 0, 0, j)),
        compiler_params=_compiler_params(("parallel", "parallel"), est),
        cost_estimate=pl.CostEstimate(
            flops=2 * b * h * w * 9 * c_pad * n_pad,
            transcendentals=0,
            bytes_accessed=(b * hp * wp * c_pad * 2 + 9 * c_pad * n_pad * 2
                            + b * h * w * n_pad * 2)),
    ))
    return _DCONV_CACHE[key]


def conv3x3_s1_direct(x_nhwc, p, relu):
    b, h, w, c_pad = x_nhwc.shape           # c_pad <= 512 for all ResNet conv2
    xp = jnp.pad(x_nhwc, ((0, 0), (1, 1), (1, 1), (0, 0)))
    call = _dconv_call(b, h, w, c_pad, p["w"].shape[-1], relu)
    return call(xp, p["w"], p["sb"])


# ------------------------------------------------------------------- conv glue
def _im2col(x_nhwc, k, stride, pad):
    """Patch extraction for the 7x7 stem and the 3 stride-2 3x3 convs only."""
    x = jnp.pad(x_nhwc, ((0, 0), (pad, pad), (pad, pad), (0, 0)))
    _, hp, wp, c = x.shape
    ho = (hp - k) // stride + 1
    wo = (wp - k) // stride + 1
    cols = []
    for i in range(k):
        for j in range(k):
            cols.append(x[:, i:i + stride * (ho - 1) + 1:stride,
                          j:j + stride * (wo - 1) + 1:stride, :])
    patches = jnp.stack(cols, axis=3)                 # (B, Ho, Wo, k*k, C)
    b = x_nhwc.shape[0]
    return patches.reshape(b * ho * wo, k * k * c), ho, wo


def conv_bn_act(x_nhwc, p, relu, residual=None):
    k, stride = p["k"], p["stride"]
    b = x_nhwc.shape[0]
    n_pad = p["w"].shape[-1]
    if k == 3 and stride == 1:
        return conv3x3_s1_direct(x_nhwc, p, relu)
    if k == 1:
        xs = x_nhwc[:, ::stride, ::stride, :] if stride > 1 else x_nhwc
        ho, wo = xs.shape[1], xs.shape[2]
        cols = xs.reshape(b * ho * wo, xs.shape[3])
        w2d = p["w"]
    else:
        # TODO(synk): the 7x7 stem and the 3 stride-2 3x3 convs still build an
        # im2col slab in HBM; fold their window into the kernel if they matter.
        cols, ho, wo = _im2col(x_nhwc, k, stride, p["pad"])
        w2d = p["w"].reshape(-1, n_pad) if p["w"].ndim == 3 else p["w"]
    res2d = residual.reshape(b * ho * wo, n_pad) if residual is not None else None
    out = matmul_bn_act(cols, w2d, p["sb"], relu, residual=res2d)
    return out.reshape(b, ho, wo, n_pad)


def max_pool_3x3_s2(x_nhwc):
    b, h, w, c = x_nhwc.shape
    xp = jnp.pad(x_nhwc, ((0, 0), (1, 1), (1, 1), (0, 0)),
                 constant_values=-jnp.inf)
    ho = (h + 2 - 3) // 2 + 1
    wo = (w + 2 - 3) // 2 + 1
    # TODO(synk): the 9x shifted slab could be avoided by fusing the pool into
    # the stem-conv epilogue; with C padded to 128 the stores are lane-dense.
    shifts = [xp[:, i:i + 2 * ho - 1:2, j:j + 2 * wo - 1:2, :]
              for i in range(3) for j in range(3)]
    slab = jnp.stack(shifts, axis=0).reshape(9, b * ho * wo, c)

    m = b * ho * wo
    tm, m_pad = _tm_and_mpad(m)
    if m_pad != m:
        slab = jnp.pad(slab, ((0, 0), (0, m_pad - m), (0, 0)))

    key = (m_pad, tm, c, str(slab.dtype))
    if key not in _MAXPOOL_CACHE:
        _MAXPOOL_CACHE[key] = jax.jit(pl.pallas_call(
            _maxpool_kernel,
            out_shape=jax.ShapeDtypeStruct((m_pad, c), slab.dtype),
            grid=(m_pad // tm,),
            in_specs=[pl.BlockSpec((9, tm, c), lambda i: (0, i, 0))],
            out_specs=pl.BlockSpec((tm, c), lambda i: (i, 0)),
            compiler_params=pltpu.CompilerParams(
                dimension_semantics=("parallel",)),
        ))
    return _MAXPOOL_CACHE[key](slab)[:m].reshape(b, ho, wo, c)


def gap_fc(x_nhwc, fc_w, fc_b):
    b, h, w, c = x_nhwc.shape
    x3 = x_nhwc.reshape(b, h * w, c)
    n_pad = fc_w.shape[1]
    key = (b, h * w, c, n_pad)
    if key not in _GAPFC_CACHE:
        _GAPFC_CACHE[key] = jax.jit(pl.pallas_call(
            _gap_fc_kernel,
            out_shape=jax.ShapeDtypeStruct((b, n_pad), jnp.float32),
            grid=(1,),
            in_specs=[
                pl.BlockSpec((b, h * w, c), lambda i: (0, 0, 0)),
                pl.BlockSpec((c, n_pad), lambda i: (0, 0)),
                pl.BlockSpec((1, n_pad), lambda i: (0, 0)),
            ],
            out_specs=pl.BlockSpec((b, n_pad), lambda i: (0, 0)),
            compiler_params=pltpu.CompilerParams(
                dimension_semantics=("arbitrary",)),
        ))
    return _GAPFC_CACHE[key](x3, fc_w, fc_b)


# ------------------------------------- parameters (deterministic synthetic init)
def _make_conv_bn(key, cin, cout, k, stride, gamma_scale=1.0, raw_cin=False):
    kw_, kg, kb = jax.random.split(key, 3)
    fan_in = cin * k * k
    w = jax.random.normal(kw_, (k, k, cin, cout), jnp.float32) * jnp.sqrt(2.0 / fan_in)
    gamma = (1.0 + 0.1 * jax.random.normal(kg, (cout,), jnp.float32)) * gamma_scale
    beta = 0.05 * jax.random.normal(kb, (cout,), jnp.float32)
    # eval-mode BN folded into affine: running_mean=0, running_var=1
    scale = gamma / jnp.sqrt(1.0 + _EPS)
    bias = beta
    cout_p = _round_up(cout, 128)
    sb = jnp.zeros((2, cout_p), jnp.float32)
    sb = sb.at[0, :cout].set(scale).at[1, :cout].set(bias)

    if k == 1:
        cin_p = _round_up(cin, 128)
        w_p = jnp.zeros((cin_p, cout_p), jnp.bfloat16)
        w_p = w_p.at[:cin, :cout].set(w.reshape(cin, cout).astype(jnp.bfloat16))
    elif raw_cin:  # stem: patches carry the raw (unpadded) input channels
        kk = k * k * cin
        k_pad = _round_up(kk, 128)
        w_p = jnp.zeros((k_pad, cout_p), jnp.bfloat16)
        w_p = w_p.at[:kk, :cout].set(w.reshape(kk, cout).astype(jnp.bfloat16))
    else:  # 3x3 on channel-padded activations: (9, Cin_pad, Cout_pad)
        cin_p = _round_up(cin, 128)
        w_p = jnp.zeros((k * k, cin_p, cout_p), jnp.bfloat16)
        w_p = w_p.at[:, :cin, :cout].set(
            w.reshape(k * k, cin, cout).astype(jnp.bfloat16))
    return {"w": w_p, "sb": sb, "k": k, "stride": stride,
            "pad": (k - 1) // 2, "cout": cout}


def init_incremental_resnet_params(key, num_classes):
    counter = [0]

    def nk():
        counter[0] += 1
        return jax.random.fold_in(key, counter[0])

    params = {"stem": _make_conv_bn(nk(), 3, 64, 7, 2, raw_cin=True)}
    # ResNet-152 bottleneck config: (planes, blocks, stride)
    layers_cfg = [(64, 3, 1), (128, 8, 2), (256, 36, 2), (512, 3, 2)]
    inplanes = 64
    stages = []
    for planes, nblocks, stage_stride in layers_cfg:
        blocks = []
        for bidx in range(nblocks):
            s = stage_stride if bidx == 0 else 1
            block = {
                "conv1": _make_conv_bn(nk(), inplanes, planes, 1, 1),
                "conv2": _make_conv_bn(nk(), planes, planes, 3, s),
                "conv3": _make_conv_bn(nk(), planes, planes * 4, 1, 1,
                                       gamma_scale=0.1),
            }
            if bidx == 0:
                block["downsample"] = _make_conv_bn(nk(), inplanes, planes * 4,
                                                    1, s)
            blocks.append(block)
            inplanes = planes * 4
        stages.append(blocks)
    params["stages"] = stages

    kfc_w, kfc_b = jax.random.split(nk())
    n_cls_pad = _round_up(num_classes, 128)
    fc_w = jax.random.normal(kfc_w, (2048, num_classes), jnp.float32) / jnp.sqrt(2048.0)
    fc_b = 0.01 * jax.random.normal(kfc_b, (num_classes,), jnp.float32)
    params["fc_w"] = jnp.zeros((2048, n_cls_pad), jnp.bfloat16).at[:, :num_classes].set(
        fc_w.astype(jnp.bfloat16))
    params["fc_b"] = jnp.zeros((1, n_cls_pad), jnp.float32).at[0, :num_classes].set(fc_b)
    params["num_classes"] = num_classes
    return params


# --------------------------------------------------------------------- forward
def incremental_resnet_forward(params, x_nchw):
    # NCHW (PyTorch convention) -> NHWC, bf16 activations for the MXU.
    x = jnp.transpose(x_nchw, (0, 2, 3, 1)).astype(jnp.bfloat16)

    # stem: conv7x7 s2 + BN + ReLU, maxpool 3x3 s2 (channels padded to 128)
    x = conv_bn_act(x, params["stem"], relu=True)
    x = max_pool_3x3_s2(x)

    # bottleneck stages; residual add + ReLU fused into the conv3 matmul epilogue
    for blocks in params["stages"]:
        for block in blocks:
            identity = (conv_bn_act(x, block["downsample"], relu=False)
                        if "downsample" in block else x)
            out = conv_bn_act(x, block["conv1"], relu=True)
            out = conv_bn_act(out, block["conv2"], relu=True)
            x = conv_bn_act(out, block["conv3"], relu=True, residual=identity)

    # fused adaptive-avg-pool(1x1) + flatten + fc, sliced to real classes
    logits = gap_fc(x, params["fc_w"], params["fc_b"])
    return logits[:, :params["num_classes"]]


if __name__ == "__main__":
    num_classes = 10
    key = jax.random.PRNGKey(0)
    kp, kx = jax.random.split(key)

    params = init_incremental_resnet_params(kp, num_classes)
    # small NCHW input (3 channels as ResNet requires); 32x32 -> 1x1 final feature map
    x = jax.random.normal(kx, (2, 3, 32, 32), jnp.float32)

    logits = incremental_resnet_forward(params, x)
    logits = jax.block_until_ready(logits)

    assert logits.shape == (2, num_classes), logits.shape
    assert bool(jnp.all(jnp.isfinite(logits)))
    print("KERNEL_OK")
</pallas_src>

<mosaic_0001>
module attributes {stable_mosaic.version = 11 : i64} {
  func.func @_mm_kernel(%arg0: i32, %arg1: i32, %arg2: memref<512x256xbf16, #tpu.memory_space<vmem>>, %arg3: memref<256x128xbf16, #tpu.memory_space<vmem>>, %arg4: memref<2x128xf32, #tpu.memory_space<vmem>>, %arg5: memref<512x128xbf16, #tpu.memory_space<vmem>>) attributes {dimension_semantics = [#tpu.dimension_semantics<parallel>, #tpu.dimension_semantics<parallel>], iteration_bounds = array<i64: 1, 1>, scalar_prefetch = 0 : i64, scratch_operands = 0 : i64, tpu.core_type = #tpu.core_type<tc>, window_params = [{transform_indices = @transform_0, window_bounds = array<i64: 512, 256>}, {transform_indices = @transform_1, window_bounds = array<i64: 256, 128>}, {transform_indices = @transform_2, window_bounds = array<i64: 2, 128>}, {transform_indices = @transform_3, window_bounds = array<i64: 512, 128>}]} {
    %c0 = arith.constant 0 : index
    %c0_0 = arith.constant 0 : index
    %0 = vector.load %arg2[%c0, %c0_0] : memref<512x256xbf16, #tpu.memory_space<vmem>>, vector<512x256xbf16>
    %c0_1 = arith.constant 0 : index
    %c0_2 = arith.constant 0 : index
    %1 = vector.load %arg3[%c0_1, %c0_2] : memref<256x128xbf16, #tpu.memory_space<vmem>>, vector<256x128xbf16>
    %cst = arith.constant dense<0.000000e+00> : vector<512x128xf32>
    %2 = tpu.matmul %0, %1, %cst {dimension_numbers = #tpu.dot_dimension_numbers<[1], [0], [0], [1], [0, 0, 1, 1], [], []>} : vector<512x256xbf16>, vector<256x128xbf16>, vector<512x128xf32> -> vector<512x128xf32>
    %c0_3 = arith.constant 0 : index
    %c0_4 = arith.constant 0 : index
    %3 = vector.load %arg4[%c0_3, %c0_4] : memref<2x128xf32, #tpu.memory_space<vmem>>, vector<1x128xf32>
    %4 = vector.broadcast %3 : vector<1x128xf32> to vector<512x128xf32>
    %5 = arith.mulf %2, %4 : vector<512x128xf32>
    %c1 = arith.constant 1 : index
    %c0_5 = arith.constant 0 : index
    %6 = vector.load %arg4[%c1, %c0_5] : memref<2x128xf32, #tpu.memory_space<vmem>>, vector<1x128xf32>
    %7 = vector.broadcast %6 : vector<1x128xf32> to vector<512x128xf32>
    %8 = arith.addf %5, %7 : vector<512x128xf32>
    %cst_6 = arith.constant 0.000000e+00 : f32
    %9 = vector.broadcast %cst_6 : f32 to vector<512x128xf32>
    %10 = arith.maximumf %8, %9 : vector<512x128xf32>
    %11 = arith.truncf %10 : vector<512x128xf32> to vector<512x128xbf16>
    %c0_7 = arith.constant 0 : index
    %c0_8 = arith.constant 0 : index
    %12 = vector.load %arg5[%c0_7, %c0_8] : memref<512x128xbf16, #tpu.memory_space<vmem>>, vector<512x128xbf16>
    tpu.vector_store %arg5[%c0_7, %c0_8], %11 {strides = array<i32>} : memref<512x128xbf16, #tpu.memory_space<vmem>>, vector<512x128xbf16>,
    return
  }
  func.func @transform_0(%arg0: i32, %arg1: i32) -> (i32, i32) {
    %c0_i32 = arith.constant 0 : i32
    %c0_i32_0 = arith.constant 0 : i32
    return %arg0, %c0_i32 : i32, i32
  }
  func.func @transform_1(%arg0: i32, %arg1: i32) -> (i32, i32) {
    %c0_i32 = arith.constant 0 : i32
    %c0_i32_0 = arith.constant 0 : i32
    return %c0_i32, %arg1 : i32, i32
  }
  func.func @transform_2(%arg0: i32, %arg1: i32) -> (i32, i32) {
    %c0_i32 = arith.constant 0 : i32
    %c0_i32_0 = arith.constant 0 : i32
    return %c0_i32, %arg1 : i32, i32
  }
  func.func @transform_3(%arg0: i32, %arg1: i32) -> (i32, i32) {
    %c0_i32 = arith.constant 0 : i32
    return %arg0, %arg1 : i32, i32
  }
}

</mosaic_0001>

<llo_original>
// kernel: tpu_custom_call.1
$region0: #{tpu_custom_call.1}
  #allocation0 [shape = 'u32[]', space=smem, size = 0x4, offset = 0x4, fixed_abs, tag = 'smem constant byte address 0x4 - core index']
  #allocation1 [shape = 'u32[144,128]{1,0:T(1,128)}', space=vmem, size = 0x12000, scoped, tag = 'internal scratch']
  %s0 = inlined_call_operand.hbm [shape: bf16[512,256], index: 0, kind: input, shape index: {}]
  %s1 = inlined_call_operand.hbm [shape: bf16[256,128], index: 1, kind: input, shape index: {}]
  %s2 = inlined_call_operand.vmem [shape: f32[2,128], index: 2, kind: input, shape index: {}]
  %s3 = inlined_call_operand.hbm [shape: bf16[512,128], index: 3, kind: output, shape index: {}]
  %s4 = sld [smem:[#allocation0]]
  $region30: #{tpu_custom_call.1} parent=0
    _
  %s6 = ssub.s32 1, %s4
  %s7 = scalar_select 0, %s6, %s4
  $region1: #{tpu_custom_call.1} parent=0
    #allocation2 [shape = 'u8[262144]{0}', space=vmem, size = 0x40000, scoped, tag = 'input window, operand 0, single buffered']
    #allocation3 [shape = 's32[1]{0}', space=sflag, size = 0x4, scoped, tag = 'scoped memory for tpu_custom_call.1']
    #allocation4 [shape = 's32[1]{0}', space=sflag, size = 0x4, scoped, tag = 'scoped memory for tpu_custom_call.1']
    #allocation5 [shape = 'u8[65536]{0}', space=vmem, size = 0x10000, scoped, tag = 'input window, operand 1, single buffered']
    #allocation6 [shape = 's32[1]{0}', space=sflag, size = 0x4, scoped, tag = 'scoped memory for tpu_custom_call.1']
    #allocation7 [shape = 'u8[131072]{0}', space=vmem, size = 0x20000, scoped, tag = 'output window, operand 0, single buffered']
    %8 = vsyncpa [#allocation3], 0
    %9 = vsyncpa [#allocation6], 0
    %10 = vsyncpa [#allocation4], 0
    // Predicated region
    $region2: #{tpu_custom_call.1} parent=1 // pred_check
      _
    $region3: #{tpu_custom_call.1} parent=1 // pred_check_branch
      %12 = sbr.rel (0) target = $region5
    $region4: #{tpu_custom_call.1} parent=1 // pred_region
      %s14 = ssub.s32 8192, 8192
      %15 = vsyncadd [#allocation3], %s14
      %s16 = sshll.u32 [#allocation2], 4
      %s17 = int_to_ptr.vmem [resolvable:$true] %s16
      %22 = dma.hbm_to_vmem [thread:$0]  %s0, 8192, %s17, [#allocation3], 128, 128, 8
    $region5: #{tpu_custom_call.1} parent=1 // pred_fallthru
      _
    // Predicated region
    $region6: #{tpu_custom_call.1} parent=1 // pred_check
      _
    $region7: #{tpu_custom_call.1} parent=1 // pred_check_branch
      %24 = sbr.rel (0) target = $region9
    $region8: #{tpu_custom_call.1} parent=1 // pred_region
      %s26 = ssub.s32 2048, 2048
      %27 = vsyncadd [#allocation6], %s26
      %s28 = sshll.u32 [#allocation5], 4
      %s29 = int_to_ptr.vmem [resolvable:$true] %s28
      %34 = dma.hbm_to_vmem [thread:$0]  %s1, 2048, %s29, [#allocation6], 64, 64, 4
    $region9: #{tpu_custom_call.1} parent=1 // pred_fallthru
      _
    // Predicated region
    $region10: #{tpu_custom_call.1} parent=1 // pred_check
      _
    $region11: #{tpu_custom_call.1} parent=1 // pred_check_branch
      %36 = sbr.rel (0) target = $region13
    $region12: #{tpu_custom_call.1} parent=1 // pred_region
      _
    $region13: #{tpu_custom_call.1} parent=1 // pred_fallthru
      _
    // Predicated region
    $region14: #{tpu_custom_call.1} parent=1 // pred_check
      _
    $region15: #{tpu_custom_call.1} parent=1 // pred_check_branch
      %38 = sbr.rel (0) target = $region17
    $region16: #{tpu_custom_call.1} parent=1 // pred_region
      %39 = dma.done [#allocation3], 8192
    $region17: #{tpu_custom_call.1} parent=1 // pred_fallthru
      _
    // Predicated region
    $region18: #{tpu_custom_call.1} parent=1 // pred_check
      _
    $region19: #{tpu_custom_call.1} parent=1 // pred_check_branch
      %41 = sbr.rel (0) target = $region21
    $region20: #{tpu_custom_call.1} parent=1 // pred_region
      %42 = dma.done [#allocation6], 2048
    $region21: #{tpu_custom_call.1} parent=1 // pred_fallthru
      _
    %v44 = vld [vmem:[#allocation2] sm:$0xff]
    %v45 = vld [vmem:[#allocation2 + $0x8] sm:$0xff]
    %v46 = vld [vmem:[#allocation2 + $0x10] sm:$0xff]
    %v47 = vld [vmem:[#allocation2 + $0x18] sm:$0xff]
    %v48 = vld [vmem:[#allocation2 + $0x20] sm:$0xff]
    %v49 = vld [vmem:[#allocation2 + $0x28] sm:$0xff]
    %v50 = vld [vmem:[#allocation2 + $0x30] sm:$0xff]
    %v51 = vld [vmem:[#allocation2 + $0x38] sm:$0xff]
    %v52 = vld [vmem:[#allocation2 + $0x40] sm:$0xff]
    %v53 = vld [vmem:[#allocation2 + $0x48] sm:$0xff]
    %v54 = vld [vmem:[#allocation2 + $0x50] sm:$0xff]
    %v55 = vld [vmem:[#allocation2 + $0x58] sm:$0xff]
    %v56 = vld [vmem:[#allocation2 + $0x60] sm:$0xff]
    %v57 = vld [vmem:[#allocation2 + $0x68] sm:$0xff]
    %v58 = vld [vmem:[#allocation2 + $0x70] sm:$0xff]
    %v59 = vld [vmem:[#allocation2 + $0x78] sm:$0xff]
    %v60 = vld [vmem:[#allocation2 + $0x80] sm:$0xff]
    %v61 = vld [vmem:[#allocation2 + $0x88] sm:$0xff]
    %v62 = vld [vmem:[#allocation2 + $0x90] sm:$0xff]
    %v63 = vld [vmem:[#allocation2 + $0x98] sm:$0xff]
    %v64 = vld [vmem:[#allocation2 + $0xa0] sm:$0xff]
    %v65 = vld [vmem:[#allocation2 + $0xa8] sm:$0xff]
    %v66 = vld [vmem:[#allocation2 + $0xb0] sm:$0xff]
    %v67 = vld [vmem:[#allocation2 + $0xb8] sm:$0xff]
    %v68 = vld [vmem:[#allocation2 + $0xc0] sm:$0xff]
    %v69 = vld [vmem:[#allocation2 + $0xc8] sm:$0xff]
    %v70 = vld [vmem:[#allocation2 + $0xd0] sm:$0xff]
    %v71 = vld [vmem:[#allocation2 + $0xd8] sm:$0xff]
    %v72 = vld [vmem:[#allocation2 + $0xe0] sm:$0xff]
    %v73 = vld [vmem:[#allocation2 + $0xe8] sm:$0xff]
    %v74 = vld [vmem:[#allocation2 + $0xf0] sm:$0xff]
    %v75 = vld [vmem:[#allocation2 + $0xf8] sm:$0xff]
    %v76 = vld [vmem:[#allocation2 + $0x100] sm:$0xff]
    %v77 = vld [vmem:[#allocation2 + $0x108] sm:$0xff]
    %v78 = vld [vmem:[#allocation2 + $0x110] sm:$0xff]
    %v79 = vld [vmem:[#allocation2 + $0x118] sm:$0xff]
    %v80 = vld [vmem:[#allocation2 + $0x120] sm:$0xff]
    %v81 = vld [vmem:[#allocation2 + $0x128] sm:$0xff]
    %v82 = vld [vmem:[#allocation2 + $0x130] sm:$0xff]
    %v83 = vld [vmem:[#allocation2 + $0x138] sm:$0xff]
    %v84 = vld [vmem:[#allocation2 + $0x140] sm:$0xff]
    %v85 = vld [vmem:[#allocation2 + $0x148] sm:$0xff]
    %v86 = vld [vmem:[#allocation2 + $0x150] sm:$0xff]
    %v87 = vld [vmem:[#allocation2 + $0x158] sm:$0xff]
    %v88 = vld [vmem:[#allocation2 + $0x160] sm:$0xff]
    %v89 = vld [vmem:[#allocation2 + $0x168] sm:$0xff]
    %v90 = vld [vmem:[#allocation2 + $0x170] sm:$0xff]
    %v91 = vld [vmem:[#allocation2 + $0x178] sm:$0xff]
    %v92 = vld [vmem:[#allocation2 + $0x180] sm:$0xff]
    %v93 = vld [vmem:[#allocation2 + $0x188] sm:$0xff]
    %v94 = vld [vmem:[#allocation2 + $0x190] sm:$0xff]
    %v95 = vld [vmem:[#allocation2 + $0x198] sm:$0xff]
    %v96 = vld [vmem:[#allocation2 + $0x1a0] sm:$0xff]
    %v97 = vld [vmem:[#allocation2 + $0x1a8] sm:$0xff]
    %v98 = vld [vmem:[#allocation2 + $0x1b0] sm:$0xff]
    %v99 = vld [vmem:[#allocation2 + $0x1b8] sm:$0xff]
    %v100 = vld [vmem:[#allocation2 + $0x1c0] sm:$0xff]
    %v101 = vld [vmem:[#allocation2 + $0x1c8] sm:$0xff]
    %v102 = vld [vmem:[#allocation2 + $0x1d0] sm:$0xff]
    %v103 = vld [vmem:[#allocation2 + $0x1d8] sm:$0xff]
    %v104 = vld [vmem:[#allocation2 + $0x1e0] sm:$0xff]
    %v105 = vld [vmem:[#allocation2 + $0x1e8] sm:$0xff]
    %v106 = vld [vmem:[#allocation2 + $0x1f0] sm:$0xff]
    %v107 = vld [vmem:[#allocation2 + $0x1f8] sm:$0xff]
    %v108 = vld [vmem:[#allocation5] sm:$0xf]
    %v109 = vld [vmem:[#allocation5 + $0x4] sm:$0xf]
    %v110 = vld [vmem:[#allocation5 + $0x8] sm:$0xf]
    %v111 = vld [vmem:[#allocation5 + $0xc] sm:$0xf]
    %v112 = vld [vmem:[#allocation5 + $0x10] sm:$0xf]
    %v113 = vld [vmem:[#allocation5 + $0x14] sm:$0xf]
    %v114 = vld [vmem:[#allocation5 + $0x18] sm:$0xf]
    %v115 = vld [vmem:[#allocation5 + $0x1c] sm:$0xf]
    %v116 = vld [vmem:[#allocation5 + $0x20] sm:$0xf]
    %v117 = vld [vmem:[#allocation5 + $0x24] sm:$0xf]
    %v118 = vld [vmem:[#allocation5 + $0x28] sm:$0xf]
    %v119 = vld [vmem:[#allocation5 + $0x2c] sm:$0xf]
    %v120 = vld [vmem:[#allocation5 + $0x30] sm:$0xf]
    %v121 = vld [vmem:[#allocation5 + $0x34] sm:$0xf]
    %v122 = vld [vmem:[#allocation5 + $0x38] sm:$0xf]
    %v123 = vld [vmem:[#allocation5 + $0x3c] sm:$0xf]
    %v124 = vld [vmem:[#allocation5 + $0x40] sm:$0xf]
    %v125 = vld [vmem:[#allocation5 + $0x44] sm:$0xf]
    %v126 = vld [vmem:[#allocation5 + $0x48] sm:$0xf]
    %v127 = vld [vmem:[#allocation5 + $0x4c] sm:$0xf]
    %v128 = vld [vmem:[#allocation5 + $0x50] sm:$0xf]
    %v129 = vld [vmem:[#allocation5 + $0x54] sm:$0xf]
    %v130 = vld [vmem:[#allocation5 + $0x58] sm:$0xf]
    %v131 = vld [vmem:[#allocation5 + $0x5c] sm:$0xf]
    %v132 = vld [vmem:[#allocation5 + $0x60] sm:$0xf]
    %v133 = vld [vmem:[#allocation5 + $0x64] sm:$0xf]
    %v134 = vld [vmem:[#allocation5 + $0x68] sm:$0xf]
    %v135 = vld [vmem:[#allocation5 + $0x6c] sm:$0xf]
    %v136 = vld [vmem:[#allocation5 + $0x70] sm:$0xf]
    %v137 = vld [vmem:[#allocation5 + $0x74] sm:$0xf]
    %v138 = vld [vmem:[#allocation5 + $0x78] sm:$0xf]
    %v139 = vld [vmem:[#allocation5 + $0x7c] sm:$0xf]
    %v204 = vunpack.c.l.b16 %v44
    %v205 = vunpack.c.h.b16 %v44
    %v206 = vunpack.c.l.b16 %v45
    %v207 = vunpack.c.h.b16 %v45
    %v208 = vunpack.c.l.b16 %v46
    %v209 = vunpack.c.h.b16 %v46
    %v210 = vunpack.c.l.b16 %v47
    %v211 = vunpack.c.h.b16 %v47
    %v212 = vunpack.c.l.b16 %v48
    %v213 = vunpack.c.h.b16 %v48
    %v214 = vunpack.c.l.b16 %v49
    %v215 = vunpack.c.h.b16 %v49
    %v216 = vunpack.c.l.b16 %v50
    %v217 = vunpack.c.h.b16 %v50
    %v218 = vunpack.c.l.b16 %v51
    %v219 = vunpack.c.h.b16 %v51
    %v220 = vunpack.c.l.b16 %v52
    %v221 = vunpack.c.h.b16 %v52
    %v222 = vunpack.c.l.b16 %v53
    %v223 = vunpack.c.h.b16 %v53
    %v224 = vunpack.c.l.b16 %v54
    %v225 = vunpack.c.h.b16 %v54
    %v226 = vunpack.c.l.b16 %v55
    %v227 = vunpack.c.h.b16 %v55
    %v228 = vunpack.c.l.b16 %v56
    %v229 = vunpack.c.h.b16 %v56
    %v230 = vunpack.c.l.b16 %v57
    %v231 = vunpack.c.h.b16 %v57
    %v232 = vunpack.c.l.b16 %v58
    %v233 = vunpack.c.h.b16 %v58
    %v234 = vunpack.c.l.b16 %v59
    %v235 = vunpack.c.h.b16 %v59
    %v236 = vunpack.c.l.b16 %v60
    %v237 = vunpack.c.h.b16 %v60
    %v238 = vunpack.c.l.b16 %v61
    %v239 = vunpack.c.h.b16 %v61
    %v240 = vunpack.c.l.b16 %v62
    %v241 = vunpack.c.h.b16 %v62
    %v242 = vunpack.c.l.b16 %v63
    %v243 = vunpack.c.h.b16 %v63
    %v244 = vunpack.c.l.b16 %v64
    %v245 = vunpack.c.h.b16 %v64
    %v246 = vunpack.c.l.b16 %v65
    %v247 = vunpack.c.h.b16 %v65
    %v248 = vunpack.c.l.b16 %v66
    %v249 = vunpack.c.h.b16 %v66
    %v250 = vunpack.c.l.b16 %v67
    %v251 = vunpack.c.h.b16 %v67
    %v252 = vunpack.c.l.b16 %v68
    %v253 = vunpack.c.h.b16 %v68
    %v254 = vunpack.c.l.b16 %v69
    %v255 = vunpack.c.h.b16 %v69
    %v256 = vunpack.c.l.b16 %v70
    %v257 = vunpack.c.h.b16 %v70
    %v258 = vunpack.c.l.b16 %v71
    %v259 = vunpack.c.h.b16 %v71
    %v260 = vunpack.c.l.b16 %v72
    %v261 = vunpack.c.h.b16 %v72
    %v262 = vunpack.c.l.b16 %v73
    %v263 = vunpack.c.h.b16 %v73
    %v264 = vunpack.c.l.b16 %v74
    %v265 = vunpack.c.h.b16 %v74
    %v266 = vunpack.c.l.b16 %v75
    %v267 = vunpack.c.h.b16 %v75
    %v268 = vunpack.c.l.b16 %v76
    %v269 = vunpack.c.h.b16 %v76
    %v270 = vunpack.c.l.b16 %v77
    %v271 = vunpack.c.h.b16 %v77
    %v272 = vunpack.c.l.b16 %v78
    %v273 = vunpack.c.h.b16 %v78
    %v274 = vunpack.c.l.b16 %v79
    %v275 = vunpack.c.h.b16 %v79
    %v276 = vunpack.c.l.b16 %v80
    %v277 = vunpack.c.h.b16 %v80
    %v278 = vunpack.c.l.b16 %v81
    %v279 = vunpack.c.h.b16 %v81
    %v280 = vunpack.c.l.b16 %v82
    %v281 = vunpack.c.h.b16 %v82
    %v282 = vunpack.c.l.b16 %v83
    %v283 = vunpack.c.h.b16 %v83
    %v284 = vunpack.c.l.b16 %v84
    %v285 = vunpack.c.h.b16 %v84
    %v286 = vunpack.c.l.b16 %v85
    %v287 = vunpack.c.h.b16 %v85
    %v288 = vunpack.c.l.b16 %v86
    %v289 = vunpack.c.h.b16 %v86
    %v290 = vunpack.c.l.b16 %v87
    %v291 = vunpack.c.h.b16 %v87
    %v292 = vunpack.c.l.b16 %v88
    %v293 = vunpack.c.h.b16 %v88
    %v294 = vunpack.c.l.b16 %v89
    %v295 = vunpack.c.h.b16 %v89
    %v296 = vunpack.c.l.b16 %v90
    %v297 = vunpack.c.h.b16 %v90
    %v298 = vunpack.c.l.b16 %v91
    %v299 = vunpack.c.h.b16 %v91
    %v300 = vunpack.c.l.b16 %v92
    %v301 = vunpack.c.h.b16 %v92
    %v302 = vunpack.c.l.b16 %v93
    %v303 = vunpack.c.h.b16 %v93
    %v304 = vunpack.c.l.b16 %v94
    %v305 = vunpack.c.h.b16 %v94
    %v306 = vunpack.c.l.b16 %v95
    %v307 = vunpack.c.h.b16 %v95
    %v308 = vunpack.c.l.b16 %v96
    %v309 = vunpack.c.h.b16 %v96
    %v310 = vunpack.c.l.b16 %v97
    %v311 = vunpack.c.h.b16 %v97
    %v312 = vunpack.c.l.b16 %v98
    %v313 = vunpack.c.h.b16 %v98
    %v314 = vunpack.c.l.b16 %v99
    %v315 = vunpack.c.h.b16 %v99
    %v316 = vunpack.c.l.b16 %v100
    %v317 = vunpack.c.h.b16 %v100
    %v318 = vunpack.c.l.b16 %v101
    %v319 = vunpack.c.h.b16 %v101
    %v320 = vunpack.c.l.b16 %v102
    %v321 = vunpack.c.h.b16 %v102
    %v322 = vunpack.c.l.b16 %v103
    %v323 = vunpack.c.h.b16 %v103
    %v324 = vunpack.c.l.b16 %v104
    %v325 = vunpack.c.h.b16 %v104
    %v326 = vunpack.c.l.b16 %v105
    %v327 = vunpack.c.h.b16 %v105
    %v328 = vunpack.c.l.b16 %v106
    %v329 = vunpack.c.h.b16 %v106
    %v330 = vunpack.c.l.b16 %v107
    %v331 = vunpack.c.h.b16 %v107
    %v332 = vpack.c.b16 %v206, %v204
    %v333 = vpack.c.b16 %v207, %v205
    %v334 = vpack.c.b16 %v210, %v208
    %v335 = vpack.c.b16 %v211, %v209
    %v336 = vpack.c.b16 %v214, %v212
    %v337 = vpack.c.b16 %v215, %v213
    %v338 = vpack.c.b16 %v218, %v216
    %v339 = vpack.c.b16 %v219, %v217
    %v340 = vpack.c.b16 %v222, %v220
    %v341 = vpack.c.b16 %v223, %v221
    %v342 = vpack.c.b16 %v226, %v224
    %v343 = vpack.c.b16 %v227, %v225
    %v344 = vpack.c.b16 %v230, %v228
    %v345 = vpack.c.b16 %v231, %v229
    %v346 = vpack.c.b16 %v234, %v232
    %v347 = vpack.c.b16 %v235, %v233
    %v348 = vpack.c.b16 %v238, %v236
    %v349 = vpack.c.b16 %v239, %v237
    %v350 = vpack.c.b16 %v242, %v240
    %v351 = vpack.c.b16 %v243, %v241
    %v352 = vpack.c.b16 %v246, %v244
    %v353 = vpack.c.b16 %v247, %v245
    %v354 = vpack.c.b16 %v250, %v248
    %v355 = vpack.c.b16 %v251, %v249
    %v356 = vpack.c.b16 %v254, %v252
    %v357 = vpack.c.b16 %v255, %v253
    %v358 = vpack.c.b16 %v258, %v256
    %v359 = vpack.c.b16 %v259, %v257
    %v360 = vpack.c.b16 %v262, %v260
    %v361 = vpack.c.b16 %v263, %v261
    %v362 = vpack.c.b16 %v266, %v264
    %v363 = vpack.c.b16 %v267, %v265
    %v364 = vpack.c.b16 %v270, %v268
    %v365 = vpack.c.b16 %v271, %v269
    %v366 = vpack.c.b16 %v274, %v272
    %v367 = vpack.c.b16 %v275, %v273
    %v368 = vpack.c.b16 %v278, %v276
    %v369 = vpack.c.b16 %v279, %v277
    %v370 = vpack.c.b16 %v282, %v280
    %v371 = vpack.c.b16 %v283, %v281
    %v372 = vpack.c.b16 %v286, %v284
    %v373 = vpack.c.b16 %v287, %v285
    %v374 = vpack.c.b16 %v290, %v288
    %v375 = vpack.c.b16 %v291, %v289
    %v376 = vpack.c.b16 %v294, %v292
    %v377 = vpack.c.b16 %v295, %v293
    %v378 = vpack.c.b16 %v298, %v296
    %v379 = vpack.c.b16 %v299, %v297
    %v380 = vpack.c.b16 %v302, %v300
    %v381 = vpack.c.b16 %v303, %v301
    %v382 = vpack.c.b16 %v306, %v304
    %v383 = vpack.c.b16 %v307, %v305
    %v384 = vpack.c.b16 %v310, %v308
    %v385 = vpack.c.b16 %v311, %v309
    %v386 = vpack.c.b16 %v314, %v312
    %v387 = vpack.c.b16 %v315, %v313
    %v388 = vpack.c.b16 %v318, %v316
    %v389 = vpack.c.b16 %v319, %v317
    %v390 = vpack.c.b16 %v322, %v320
    %v391 = vpack.c.b16 %v323, %v321
    %v392 = vpack.c.b16 %v326, %v324
    %v393 = vpack.c.b16 %v327, %v325
    %v394 = vpack.c.b16 %v330, %v328
    %v395 = vpack.c.b16 %v331, %v329
    %v492 = vunpack.c.l.b16 %v108
    %v493 = vunpack.c.l.b16 %v109
    %v494 = vunpack.c.l.b16 %v110
    %v495 = vunpack.c.l.b16 %v111
    %v496 = vunpack.c.l.b16 %v112
    %v497 = vunpack.c.l.b16 %v113
    %v498 = vunpack.c.l.b16 %v114
    %v499 = vunpack.c.l.b16 %v115
    %v500 = vunpack.c.l.b16 %v116
    %v501 = vunpack.c.l.b16 %v117
    %v502 = vunpack.c.l.b16 %v118
    %v503 = vunpack.c.l.b16 %v119
    %v504 = vunpack.c.l.b16 %v120
    %v505 = vunpack.c.l.b16 %v121
    %v506 = vunpack.c.l.b16 %v122
    %v507 = vunpack.c.l.b16 %v123
    %v508 = vunpack.c.l.b16 %v124
    %v509 = vunpack.c.l.b16 %v125
    %v510 = vunpack.c.l.b16 %v126
    %v511 = vunpack.c.l.b16 %v127
    %v512 = vunpack.c.l.b16 %v128
    %v513 = vunpack.c.l.b16 %v129
    %v514 = vunpack.c.l.b16 %v130
    %v515 = vunpack.c.l.b16 %v131
    %v516 = vunpack.c.l.b16 %v132
    %v517 = vunpack.c.l.b16 %v133
    %v518 = vunpack.c.l.b16 %v134
    %v519 = vunpack.c.l.b16 %v135
    %v520 = vunpack.c.l.b16 %v136
    %v521 = vunpack.c.l.b16 %v137
    %v522 = vunpack.c.l.b16 %v138
    %v523 = vunpack.c.l.b16 %v139
    %v524 = vpack.c.b16 %v493, %v492
    %v525 = vpack.c.b16 %v495, %v494
    %v526 = vpack.c.b16 %v497, %v496
    %v527 = vpack.c.b16 %v499, %v498
    %v528 = vpack.c.b16 %v501, %v500
    %v529 = vpack.c.b16 %v503, %v502
    %v530 = vpack.c.b16 %v505, %v504
    %v531 = vpack.c.b16 %v507, %v506
    %v532 = vpack.c.b16 %v509, %v508
    %v533 = vpack.c.b16 %v511, %v510
    %v534 = vpack.c.b16 %v513, %v512
    %v535 = vpack.c.b16 %v515, %v514
    %v536 = vpack.c.b16 %v517, %v516
    %v537 = vpack.c.b16 %v519, %v518
    %v538 = vpack.c.b16 %v521, %v520
    %v539 = vpack.c.b16 %v523, %v522
    %556 = vmatprep.subr.bf16.mxu0 0
    %557 = vmatpush1.bf16.msra.mxu0 %v524
    %558 = vmatprep.subr.bf16.mxu0 0
    %559 = vmatpush1.bf16.msra.mxu0 %v525
    %560 = vmatprep.subr.bf16.mxu0 0
    %561 = vmatpush1.bf16.msra.mxu0 %v526
    %562 = vmatprep.subr.bf16.mxu0 0
    %563 = vmatpush1.bf16.msra.mxu0 %v527
    %564 = vmatprep.subr.bf16.mxu0 0
    %565 = vmatpush1.bf16.msra.mxu0 %v528
    %566 = vmatprep.subr.bf16.mxu0 0
    %567 = vmatpush1.bf16.msra.mxu0 %v529
    %568 = vmatprep.subr.bf16.mxu0 0
    %569 = vmatpush1.bf16.msra.mxu0 %v530
    %570 = vmatprep.subr.bf16.mxu0 0
    %571 = vmatpush1.bf16.msra.mxu0 %v531
    %572 = vmatprep.subr.bf16.mxu0 0
    %573 = vmatpush1.bf16.msra.mxu0 %v532
    %574 = vmatprep.subr.bf16.mxu0 0
    %575 = vmatpush1.bf16.msra.mxu0 %v533
    %576 = vmatprep.subr.bf16.mxu0 0
    %577 = vmatpush1.bf16.msra.mxu0 %v534
    %578 = vmatprep.subr.bf16.mxu0 0
    %579 = vmatpush1.bf16.msra.mxu0 %v535
    %580 = vmatprep.subr.bf16.mxu0 0
    %581 = vmatpush1.bf16.msra.mxu0 %v536
    %582 = vmatprep.subr.bf16.mxu0 0
    %583 = vmatpush1.bf16.msra.mxu0 %v537
    %584 = vmatprep.subr.bf16.mxu0 0
    %585 = vmatpush1.bf16.msra.mxu0 %v538
    %586 = vmatprep.subr.bf16.mxu0 0
    %587 = vmatpush1.bf16.msra.mxu0 %v539
    %588 = vmatprep.mubr.bf16.mxu0 %v333
    %589 = vmatmul.mubr.bf16.gmra.mrb[0].mxu0 %v332
    %v590 = vpop.f32.mrb[0].mxu0
    %v591 = vadd.f32 0.0, %v590
    %v592 = vpop.f32.mrb[0].mxu0
    %v593 = vpop.f32.mrb[0].mxu0
    %v594 = vadd.f32 0.0, %v593
    %v595 = vpop.f32.mrb[0].mxu0
    %596 = vmatprep.mubr.bf16.mxu0 %v335
    %597 = vmatmul.mubr.bf16.gmra.mrb[0].mxu0 %v334
    %v598 = vpop.f32.mrb[0].mxu0
    %v599 = vadd.f32 0.0, %v598
    %v600 = vpop.f32.mrb[0].mxu0
    %v601 = vpop.f32.mrb[0].mxu0
    %v602 = vadd.f32 0.0, %v601
    %v603 = vpop.f32.mrb[0].mxu0
    %604 = vmatprep.mubr.bf16.mxu0 %v337
    %605 = vmatmul.mubr.bf16.gmra.mrb[0].mxu0 %v336
    %v606 = vpop.f32.mrb[0].mxu0
    %v607 = vadd.f32 0.0, %v606
    %v608 = vpop.f32.mrb[0].mxu0
    %v609 = vpop.f32.mrb[0].mxu0
    %v610 = vadd.f32 0.0, %v609
    %v611 = vpop.f32.mrb[0].mxu0
    %612 = vmatprep.mubr.bf16.mxu0 %v339
    %613 = vmatmul.mubr.bf16.gmra.mrb[0].mxu0 %v338
    %v614 = vpop.f32.mrb[0].mxu0
    %v615 = vadd.f32 0.0, %v614
    %v616 = vpop.f32.mrb[0].mxu0
    %v617 = vpop.f32.mrb[0].mxu0
    %v618 = vadd.f32 0.0, %v617
    %v619 = vpop.f32.mrb[0].mxu0
    %620 = vmatprep.mubr.bf16.mxu0 %v341
    %621 = vmatmul.mubr.bf16.gmra.mrb[0].mxu0 %v340
    %v622 = vpop.f32.mrb[0].mxu0
    %v623 = vadd.f32 0.0, %v622
    %v624 = vpop.f32.mrb[0].mxu0
    %v625 = vpop.f32.mrb[0].mxu0
    %v626 = vadd.f32 0.0, %v625
    %v627 = vpop.f32.mrb[0].mxu0
    %628 = vmatprep.mubr.bf16.mxu0 %v343
    %629 = vmatmul.mubr.bf16.gmra.mrb[0].mxu0 %v342
    %v630 = vpop.f32.mrb[0].mxu0
    %v631 = vadd.f32 0.0, %v630
    %v632 = vpop.f32.mrb[0].mxu0
    %v633 = vpop.f32.mrb[0].mxu0
    %v634 = vadd.f32 0.0, %v633
    %v635 = vpop.f32.mrb[0].mxu0
    %636 = vmatprep.mubr.bf16.mxu0 %v345
    %637 = vmatmul.mubr.bf16.gmra.mrb[0].mxu0 %v344
    %v638 = vpop.f32.mrb[0].mxu0
    %v639 = vadd.f32 0.0, %v638
    %v640 = vpop.f32.mrb[0].mxu0
    %v641 = vpop.f32.mrb[0].mxu0
    %v642 = vadd.f32 0.0, %v641
    %v643 = vpop.f32.mrb[0].mxu0
    %644 = vmatprep.mubr.bf16.mxu0 %v347
    %645 = vmatmul.mubr.bf16.gmra.mrb[0].mxu0 %v346
    %v646 = vpop.f32.mrb[0].mxu0
    %v647 = vadd.f32 0.0, %v646
    %v648 = vpop.f32.mrb[0].mxu0
    %v649 = vpop.f32.mrb[0].mxu0
    %v650 = vadd.f32 0.0, %v649
    %v651 = vpop.f32.mrb[0].mxu0
    %652 = vmatprep.mubr.bf16.mxu0 %v349
    %653 = vmatmul.mubr.bf16.gmra.mrb[0].mxu0 %v348
    %v654 = vpop.f32.mrb[0].mxu0
    %v655 = vadd.f32 0.0, %v654
    %v656 = vpop.f32.mrb[0].mxu0
    %v657 = vpop.f32.mrb[0].mxu0
    %v658 = vadd.f32 0.0, %v657
    %v659 = vpop.f32.mrb[0].mxu0
    %660 = vmatprep.mubr.bf16.mxu0 %v351
    %661 = vmatmul.mubr.bf16.gmra.mrb[0].mxu0 %v350
    %v662 = vpop.f32.mrb[0].mxu0
    %v663 = vadd.f32 0.0, %v662
    %v664 = vpop.f32.mrb[0].mxu0
    %v665 = vpop.f32.mrb[0].mxu0
    %v666 = vadd.f32 0.0, %v665
    %v667 = vpop.f32.mrb[0].mxu0
    %668 = vmatprep.mubr.bf16.mxu0 %v353
    %669 = vmatmul.mubr.bf16.gmra.mrb[0].mxu0 %v352
    %v670 = vpop.f32.mrb[0].mxu0
    %v671 = vadd.f32 0.0, %v670
    %v672 = vpop.f32.mrb[0].mxu0
    %v673 = vpop.f32.mrb[0].mxu0
    %v674 = vadd.f32 0.0, %v673
    %v675 = vpop.f32.mrb[0].mxu0
    %676 = vmatprep.mubr.bf16.mxu0 %v355
    %677 = vmatmul.mubr.bf16.gmra.mrb[0].mxu0 %v354
    %v678 = vpop.f32.mrb[0].mxu0
    %v679 = vadd.f32 0.0, %v678
    %v680 = vpop.f32.mrb[0].mxu0
    %v681 = vpop.f32.mrb[0].mxu0
    %v682 = vadd.f32 0.0, %v681
    %v683 = vpop.f32.mrb[0].mxu0
    %684 = vmatprep.mubr.bf16.mxu0 %v357
    %685 = vmatmul.mubr.bf16.gmra.mrb[0].mxu0 %v356
    %v686 = vpop.f32.mrb[0].mxu0
    %v687 = vadd.f32 0.0, %v686
    %v688 = vpop.f32.mrb[0].mxu0
    %v689 = vpop.f32.mrb[0].mxu0
    %v690 = vadd.f32 0.0, %v689
    %v691 = vpop.f32.mrb[0].mxu0
    %692 = vmatprep.mubr.bf16.mxu0 %v359
    %693 = vmatmul.mubr.bf16.gmra.mrb[0].mxu0 %v358
    %v694 = vpop.f32.mrb[0].mxu0
    %v695 = vadd.f32 0.0, %v694
    %v696 = vpop.f32.mrb[0].mxu0
    %v697 = vpop.f32.mrb[0].mxu0
    %v698 = vadd.f32 0.0, %v697
    %v699 = vpop.f32.mrb[0].mxu0
    %700 = vmatprep.mubr.bf16.mxu0 %v361
    %701 = vmatmul.mubr.bf16.gmra.mrb[0].mxu0 %v360
    %v702 = vpop.f32.mrb[0].mxu0
    %v703 = vadd.f32 0.0, %v702
    %v704 = vpop.f32.mrb[0].mxu0
    %v705 = vpop.f32.mrb[0].mxu0
    %v706 = vadd.f32 0.0, %v705
    %v707 = vpop.f32.mrb[0].mxu0
    %708 = vmatprep.mubr.bf16.mxu0 %v363
    %709 = vmatmul.mubr.bf16.gmra.mrb[0].mxu0 %v362
    %v710 = vpop.f32.mrb[0].mxu0
    %v711 = vadd.f32 0.0, %v710
    %v712 = vpop.f32.mrb[0].mxu0
    %v713 = vpop.f32.mrb[0].mxu0
    %v714 = vadd.f32 0.0, %v713
    %v715 = vpop.f32.mrb[0].mxu0
    %716 = vmatprep.mubr.bf16.mxu0 %v365
    %717 = vmatmul.mubr.bf16.gmra.mrb[0].mxu0 %v364
    %v718 = vpop.f32.mrb[0].mxu0
    %v719 = vadd.f32 0.0, %v718
    %v720 = vpop.f32.mrb[0].mxu0
    %v721 = vpop.f32.mrb[0].mxu0
    %v722 = vadd.f32 0.0, %v721
    %v723 = vpop.f32.mrb[0].mxu0
    %724 = vmatprep.mubr.bf16.mxu0 %v367
    %725 = vmatmul.mubr.bf16.gmra.mrb[0].mxu0 %v366
    %v726 = vpop.f32.mrb[0].mxu0
    %v727 = vadd.f32 0.0, %v726
    %v728 = vpop.f32.mrb[0].mxu0
    %v729 = vpop.f32.mrb[0].mxu0
    %v730 = vadd.f32 0.0, %v729
    %v731 = vpop.f32.mrb[0].mxu0
    %732 = vmatprep.mubr.bf16.mxu0 %v369
    %733 = vmatmul.mubr.bf16.gmra.mrb[0].mxu0 %v368
    %v734 = vpop.f32.mrb[0].mxu0
    %v735 = vadd.f32 0.0, %v734
    %v736 = vpop.f32.mrb[0].mxu0
    %v737 = vpop.f32.mrb[0].mxu0
    %v738 = vadd.f32 0.0, %v737
    %v739 = vpop.f32.mrb[0].mxu0
    %740 = vmatprep.mubr.bf16.mxu0 %v371
    %741 = vmatmul.mubr.bf16.gmra.mrb[0].mxu0 %v370
    %v742 = vpop.f32.mrb[0].mxu0
    %v743 = vadd.f32 0.0, %v742
    %v744 = vpop.f32.mrb[0].mxu0
    %v745 = vpop.f32.mrb[0].mxu0
    %v746 = vadd.f32 0.0, %v745
    %v747 = vpop.f32.mrb[0].mxu0
    %748 = vmatprep.mubr.bf16.mxu0 %v373
    %749 = vmatmul.mubr.bf16.gmra.mrb[0].mxu0 %v372
    %v750 = vpop.f32.mrb[0].mxu0
    %v751 = vadd.f32 0.0, %v750
    %v752 = vpop.f32.mrb[0].mxu0
    %v753 = vpop.f32.mrb[0].mxu0
    %v754 = vadd.f32 0.0, %v753
    %v755 = vpop.f32.mrb[0].mxu0
    %756 = vmatprep.mubr.bf16.mxu0 %v375
    %757 = vmatmul.mubr.bf16.gmra.mrb[0].mxu0 %v374
    %v758 = vpop.f32.mrb[0].mxu0
    %v759 = vadd.f32 0.0, %v758
    %v760 = vpop.f32.mrb[0].mxu0
    %v761 = vpop.f32.mrb[0].mxu0
    %v762 = vadd.f32 0.0, %v761
    %v763 = vpop.f32.mrb[0].mxu0
    %764 = vmatprep.mubr.bf16.mxu0 %v377
    %765 = vmatmul.mubr.bf16.gmra.mrb[0].mxu0 %v376
    %v766 = vpop.f32.mrb[0].mxu0
    %v767 = vadd.f32 0.0, %v766
    %v768 = vpop.f32.mrb[0].mxu0
    %v769 = vpop.f32.mrb[0].mxu0
    %v770 = vadd.f32 0.0, %v769
    %v771 = vpop.f32.mrb[0].mxu0
    %772 = vmatprep.mubr.bf16.mxu0 %v379
    %773 = vmatmul.mubr.bf16.gmra.mrb[0].mxu0 %v378
    %v774 = vpop.f32.mrb[0].mxu0
    %v775 = vadd.f32 0.0, %v774
    %v776 = vpop.f32.mrb[0].mxu0
    %v777 = vpop.f32.mrb[0].mxu0
    %v778 = vadd.f32 0.0, %v777
    %v779 = vpop.f32.mrb[0].mxu0
    %780 = vmatprep.mubr.bf16.mxu0 %v381
    %781 = vmatmul.mubr.bf16.gmra.mrb[0].mxu0 %v380
    %v782 = vpop.f32.mrb[0].mxu0
    %v783 = vadd.f32 0.0, %v782
    %v784 = vpop.f32.mrb[0].mxu0
    %v785 = vpop.f32.mrb[0].mxu0
    %v786 = vadd.f32 0.0, %v785
    %v787 = vpop.f32.mrb[0].mxu0
    %788 = vmatprep.mubr.bf16.mxu0 %v383
    %789 = vmatmul.mubr.bf16.gmra.mrb[0].mxu0 %v382
    %v790 = vpop.f32.mrb[0].mxu0
    %v791 = vadd.f32 0.0, %v790
    %v792 = vpop.f32.mrb[0].mxu0
    %v793 = vpop.f32.mrb[0].mxu0
    %v794 = vadd.f32 0.0, %v793
    %v795 = vpop.f32.mrb[0].mxu0
    %796 = vmatprep.mubr.bf16.mxu0 %v385
    %797 = vmatmul.mubr.bf16.gmra.mrb[0].mxu0 %v384
    %v798 = vpop.f32.mrb[0].mxu0
    %v799 = vadd.f32 0.0, %v798
    %v800 = vpop.f32.mrb[0].mxu0
    %v801 = vpop.f32.mrb[0].mxu0
    %v802 = vadd.f32 0.0, %v801
    %v803 = vpop.f32.mrb[0].mxu0
    %804 = vmatprep.mubr.bf16.mxu0 %v387
    %805 = vmatmul.mubr.bf16.gmra.mrb[0].mxu0 %v386
    %v806 = vpop.f32.mrb[0].mxu0
    %v807 = vadd.f32 0.0, %v806
    %v808 = vpop.f32.mrb[0].mxu0
    %v809 = vpop.f32.mrb[0].mxu0
    %v810 = vadd.f32 0.0, %v809
    %v811 = vpop.f32.mrb[0].mxu0
    %812 = vmatprep.mubr.bf16.mxu0 %v389
    %813 = vmatmul.mubr.bf16.gmra.mrb[0].mxu0 %v388
    %v814 = vpop.f32.mrb[0].mxu0
    %v815 = vadd.f32 0.0, %v814
    %v816 = vpop.f32.mrb[0].mxu0
    %v817 = vpop.f32.mrb[0].mxu0
    %v818 = vadd.f32 0.0, %v817
    %v819 = vpop.f32.mrb[0].mxu0
    %820 = vmatprep.mubr.bf16.mxu0 %v391
    %821 = vmatmul.mubr.bf16.gmra.mrb[0].mxu0 %v390
    %v822 = vpop.f32.mrb[0].mxu0
    %v823 = vadd.f32 0.0, %v822
    %v824 = vpop.f32.mrb[0].mxu0
    %v825 = vpop.f32.mrb[0].mxu0
    %v826 = vadd.f32 0.0, %v825
    %v827 = vpop.f32.mrb[0].mxu0
    %828 = vmatprep.mubr.bf16.mxu0 %v393
    %829 = vmatmul.mubr.bf16.gmra.mrb[0].mxu0 %v392
    %v830 = vpop.f32.mrb[0].mxu0
    %v831 = vadd.f32 0.0, %v830
    %v832 = vpop.f32.mrb[0].mxu0
    %v833 = vpop.f32.mrb[0].mxu0
    %v834 = vadd.f32 0.0, %v833
    %v835 = vpop.f32.mrb[0].mxu0
    %836 = vmatprep.mubr.bf16.mxu0 %v395
    %837 = vmatmul.mubr.bf16.gmra.mrb[0].mxu0 %v394
    %v838 = vpop.f32.mrb[0].mxu0
    %v839 = vadd.f32 0.0, %v838
    %v840 = vpop.f32.mrb[0].mxu0
    %v841 = vpop.f32.mrb[0].mxu0
    %v842 = vadd.f32 0.0, %v841
    %v843 = vpop.f32.mrb[0].mxu0
    %844 = vdwg.mxu0
    %v845 = vld [vmem:[%s2] sm:$0x1]
    %v846 = vlaneseq
    %v847 = vshrl.u32 %v846, 7
    %v848 = vsub.s32 0, %v847
    %v849 = vrot.slane %v845, %v848
    %v850 = vmul.f32 %v591, %v849
    %v851 = vmul.f32 %v594, %v849
    %v852 = vmul.f32 %v599, %v849
    %v853 = vmul.f32 %v602, %v849
    %v854 = vmul.f32 %v607, %v849
    %v855 = vmul.f32 %v610, %v849
    %v856 = vmul.f32 %v615, %v849
    %v857 = vmul.f32 %v618, %v849
    %v858 = vmul.f32 %v623, %v849
    %v859 = vmul.f32 %v626, %v849
    %v860 = vmul.f32 %v631, %v849
    %v861 = vmul.f32 %v634, %v849
    %v862 = vmul.f32 %v639, %v849
    %v863 = vmul.f32 %v642, %v849
    %v864 = vmul.f32 %v647, %v849
    %v865 = vmul.f32 %v650, %v849
    %v866 = vmul.f32 %v655, %v849
    %v867 = vmul.f32 %v658, %v849
    %v868 = vmul.f32 %v663, %v849
    %v869 = vmul.f32 %v666, %v849
    %v870 = vmul.f32 %v671, %v849
    %v871 = vmul.f32 %v674, %v849
    %v872 = vmul.f32 %v679, %v849
    %v873 = vmul.f32 %v682, %v849
    %v874 = vmul.f32 %v687, %v849
    %v875 = vmul.f32 %v690, %v849
    %v876 = vmul.f32 %v695, %v849
    %v877 = vmul.f32 %v698, %v849
    %v878 = vmul.f32 %v703, %v849
    %v879 = vmul.f32 %v706, %v849
    %v880 = vmul.f32 %v711, %v849
    %v881 = vmul.f32 %v714, %v849
    %v882 = vmul.f32 %v719, %v849
    %v883 = vmul.f32 %v722, %v849
    %v884 = vmul.f32 %v727, %v849
    %v885 = vmul.f32 %v730, %v849
    %v886 = vmul.f32 %v735, %v849
    %v887 = vmul.f32 %v738, %v849
    %v888 = vmul.f32 %v743, %v849
    %v889 = vmul.f32 %v746, %v849
    %v890 = vmul.f32 %v751, %v849
    %v891 = vmul.f32 %v754, %v849
    %v892 = vmul.f32 %v759, %v849
    %v893 = vmul.f32 %v762, %v849
    %v894 = vmul.f32 %v767, %v849
    %v895 = vmul.f32 %v770, %v849
    %v896 = vmul.f32 %v775, %v849
    %v897 = vmul.f32 %v778, %v849
    %v898 = vmul.f32 %v783, %v849
    %v899 = vmul.f32 %v786, %v849
    %v900 = vmul.f32 %v791, %v849
    %v901 = vmul.f32 %v794, %v849
    %v902 = vmul.f32 %v799, %v849
    %v903 = vmul.f32 %v802, %v849
    %v904 = vmul.f32 %v807, %v849
    %v905 = vmul.f32 %v810, %v849
    %v906 = vmul.f32 %v815, %v849
    %v907 = vmul.f32 %v818, %v849
    %v908 = vmul.f32 %v823, %v849
    %v909 = vmul.f32 %v826, %v849
    %v910 = vmul.f32 %v831, %v849
    %v911 = vmul.f32 %v834, %v849
    %v912 = vmul.f32 %v839, %v849
    %v913 = vmul.f32 %v842, %v849
    %v914 = vld [vmem:[%s2 + $0x1] sm:$0x1]
    %v915 = vlaneseq
    %v916 = vshrl.u32 %v915, 7
    %v917 = vsub.s32 0, %v916
    %v918 = vrot.slane %v914, %v917
    %v919 = vadd.f32 %v850, %v918
    %v920 = vadd.f32 %v851, %v918
    %v921 = vadd.f32 %v852, %v918
    %v922 = vadd.f32 %v853, %v918
    %v923 = vadd.f32 %v854, %v918
    %v924 = vadd.f32 %v855, %v918
    %v925 = vadd.f32 %v856, %v918
    %v926 = vadd.f32 %v857, %v918
    %v927 = vadd.f32 %v858, %v918
    %v928 = vadd.f32 %v859, %v918
    %v929 = vadd.f32 %v860, %v918
    %v930 = vadd.f32 %v861, %v918
    %v931 = vadd.f32 %v862, %v918
    %v932 = vadd.f32 %v863, %v918
    %v933 = vadd.f32 %v864, %v918
    %v934 = vadd.f32 %v865, %v918
    %v935 = vadd.f32 %v866, %v918
    %v936 = vadd.f32 %v867, %v918
    %v937 = vadd.f32 %v868, %v918
    %v938 = vadd.f32 %v869, %v918
    %v939 = vadd.f32 %v870, %v918
    %v940 = vadd.f32 %v871, %v918
    %v941 = vadd.f32 %v872, %v918
    %v942 = vadd.f32 %v873, %v918
    %v943 = vadd.f32 %v874, %v918
    %v944 = vadd.f32 %v875, %v918
    %v945 = vadd.f32 %v876, %v918
    %v946 = vadd.f32 %v877, %v918
    %v947 = vadd.f32 %v878, %v918
    %v948 = vadd.f32 %v879, %v918
    %v949 = vadd.f32 %v880, %v918
    %v950 = vadd.f32 %v881, %v918
    %v951 = vadd.f32 %v882, %v918
    %v952 = vadd.f32 %v883, %v918
    %v953 = vadd.f32 %v884, %v918
    %v954 = vadd.f32 %v885, %v918
    %v955 = vadd.f32 %v886, %v918
    %v956 = vadd.f32 %v887, %v918
    %v957 = vadd.f32 %v888, %v918
    %v958 = vadd.f32 %v889, %v918
    %v959 = vadd.f32 %v890, %v918
    %v960 = vadd.f32 %v891, %v918
    %v961 = vadd.f32 %v892, %v918
    %v962 = vadd.f32 %v893, %v918
    %v963 = vadd.f32 %v894, %v918
    %v964 = vadd.f32 %v895, %v918
    %v965 = vadd.f32 %v896, %v918
    %v966 = vadd.f32 %v897, %v918
    %v967 = vadd.f32 %v898, %v918
    %v968 = vadd.f32 %v899, %v918
    %v969 = vadd.f32 %v900, %v918
    %v970 = vadd.f32 %v901, %v918
    %v971 = vadd.f32 %v902, %v918
    %v972 = vadd.f32 %v903, %v918
    %v973 = vadd.f32 %v904, %v918
    %v974 = vadd.f32 %v905, %v918
    %v975 = vadd.f32 %v906, %v918
    %v976 = vadd.f32 %v907, %v918
    %v977 = vadd.f32 %v908, %v918
    %v978 = vadd.f32 %v909, %v918
    %v979 = vadd.f32 %v910, %v918
    %v980 = vadd.f32 %v911, %v918
    %v981 = vadd.f32 %v912, %v918
    %v982 = vadd.f32 %v913, %v918
    %v983 = vmax.f32 %v919, 0.0
    %v984 = vmax.f32 %v920, 0.0
    %v985 = vmax.f32 %v921, 0.0
    %v986 = vmax.f32 %v922, 0.0
    %v987 = vmax.f32 %v923, 0.0
    %v988 = vmax.f32 %v924, 0.0
    %v989 = vmax.f32 %v925, 0.0
    %v990 = vmax.f32 %v926, 0.0
    %v991 = vmax.f32 %v927, 0.0
    %v992 = vmax.f32 %v928, 0.0
    %v993 = vmax.f32 %v929, 0.0
    %v994 = vmax.f32 %v930, 0.0
    %v995 = vmax.f32 %v931, 0.0
    %v996 = vmax.f32 %v932, 0.0
    %v997 = vmax.f32 %v933, 0.0
    %v998 = vmax.f32 %v934, 0.0
    %v999 = vmax.f32 %v935, 0.0
    %v1000 = vmax.f32 %v936, 0.0
    %v1001 = vmax.f32 %v937, 0.0
    %v1002 = vmax.f32 %v938, 0.0
    %v1003 = vmax.f32 %v939, 0.0
    %v1004 = vmax.f32 %v940, 0.0
    %v1005 = vmax.f32 %v941, 0.0
    %v1006 = vmax.f32 %v942, 0.0
    %v1007 = vmax.f32 %v943, 0.0
    %v1008 = vmax.f32 %v944, 0.0
    %v1009 = vmax.f32 %v945, 0.0
    %v1010 = vmax.f32 %v946, 0.0
    %v1011 = vmax.f32 %v947, 0.0
    %v1012 = vmax.f32 %v948, 0.0
    %v1013 = vmax.f32 %v949, 0.0
    %v1014 = vmax.f32 %v950, 0.0
    %v1015 = vmax.f32 %v951, 0.0
    %v1016 = vmax.f32 %v952, 0.0
    %v1017 = vmax.f32 %v953, 0.0
    %v1018 = vmax.f32 %v954, 0.0
    %v1019 = vmax.f32 %v955, 0.0
    %v1020 = vmax.f32 %v956, 0.0
    %v1021 = vmax.f32 %v957, 0.0
    %v1022 = vmax.f32 %v958, 0.0
    %v1023 = vmax.f32 %v959, 0.0
    %v1024 = vmax.f32 %v960, 0.0
    %v1025 = vmax.f32 %v961, 0.0
    %v1026 = vmax.f32 %v962, 0.0
    %v1027 = vmax.f32 %v963, 0.0
    %v1028 = vmax.f32 %v964, 0.0
    %v1029 = vmax.f32 %v965, 0.0
    %v1030 = vmax.f32 %v966, 0.0
    %v1031 = vmax.f32 %v967, 0.0
    %v1032 = vmax.f32 %v968, 0.0
    %v1033 = vmax.f32 %v969, 0.0
    %v1034 = vmax.f32 %v970, 0.0
    %v1035 = vmax.f32 %v971, 0.0
    %v1036 = vmax.f32 %v972, 0.0
    %v1037 = vmax.f32 %v973, 0.0
    %v1038 = vmax.f32 %v974, 0.0
    %v1039 = vmax.f32 %v975, 0.0
    %v1040 = vmax.f32 %v976, 0.0
    %v1041 = vmax.f32 %v977, 0.0
    %v1042 = vmax.f32 %v978, 0.0
    %v1043 = vmax.f32 %v979, 0.0
    %v1044 = vmax.f32 %v980, 0.0
    %v1045 = vmax.f32 %v981, 0.0
    %v1046 = vmax.f32 %v982, 0.0
    %v1047 = vpack.c.bf16 %v984, %v983
    %v1048 = vpack.c.bf16 %v986, %v985
    %v1049 = vpack.c.bf16 %v988, %v987
    %v1050 = vpack.c.bf16 %v990, %v989
    %v1051 = vpack.c.bf16 %v992, %v991
    %v1052 = vpack.c.bf16 %v994, %v993
    %v1053 = vpack.c.bf16 %v996, %v995
    %v1054 = vpack.c.bf16 %v998, %v997
    %v1055 = vpack.c.bf16 %v1000, %v999
    %v1056 = vpack.c.bf16 %v1002, %v1001
    %v1057 = vpack.c.bf16 %v1004, %v1003
    %v1058 = vpack.c.bf16 %v1006, %v1005
    %v1059 = vpack.c.bf16 %v1008, %v1007
    %v1060 = vpack.c.bf16 %v1010, %v1009
    %v1061 = vpack.c.bf16 %v1012, %v1011
    %v1062 = vpack.c.bf16 %v1014, %v1013
    %v1063 = vpack.c.bf16 %v1016, %v1015
    %v1064 = vpack.c.bf16 %v1018, %v1017
    %v1065 = vpack.c.bf16 %v1020, %v1019
    %v1066 = vpack.c.bf16 %v1022, %v1021
    %v1067 = vpack.c.bf16 %v1024, %v1023
    %v1068 = vpack.c.bf16 %v1026, %v1025
    %v1069 = vpack.c.bf16 %v1028, %v1027
    %v1070 = vpack.c.bf16 %v1030, %v1029
    %v1071 = vpack.c.bf16 %v1032, %v1031
    %v1072 = vpack.c.bf16 %v1034, %v1033
    %v1073 = vpack.c.bf16 %v1036, %v1035
    %v1074 = vpack.c.bf16 %v1038, %v1037
    %v1075 = vpack.c.bf16 %v1040, %v1039
    %v1076 = vpack.c.bf16 %v1042, %v1041
    %v1077 = vpack.c.bf16 %v1044, %v1043
    %v1078 = vpack.c.bf16 %v1046, %v1045
    %v1111 = vunpack.c.l.b16 %v1047
    %v1112 = vunpack.c.h.b16 %v1047
    %v1113 = vunpack.c.l.b16 %v1048
    %v1114 = vunpack.c.h.b16 %v1048
    %v1115 = vunpack.c.l.b16 %v1049
    %v1116 = vunpack.c.h.b16 %v1049
    %v1117 = vunpack.c.l.b16 %v1050
    %v1118 = vunpack.c.h.b16 %v1050
    %v1119 = vunpack.c.l.b16 %v1051
    %v1120 = vunpack.c.h.b16 %v1051
    %v1121 = vunpack.c.l.b16 %v1052
    %v1122 = vunpack.c.h.b16 %v1052
    %v1123 = vunpack.c.l.b16 %v1053
    %v1124 = vunpack.c.h.b16 %v1053
    %v1125 = vunpack.c.l.b16 %v1054
    %v1126 = vunpack.c.h.b16 %v1054
    %v1127 = vunpack.c.l.b16 %v1055
    %v1128 = vunpack.c.h.b16 %v1055
    %v1129 = vunpack.c.l.b16 %v1056
    %v1130 = vunpack.c.h.b16 %v1056
    %v1131 = vunpack.c.l.b16 %v1057
    %v1132 = vunpack.c.h.b16 %v1057
    %v1133 = vunpack.c.l.b16 %v1058
    %v1134 = vunpack.c.h.b16 %v1058
    %v1135 = vunpack.c.l.b16 %v1059
    %v1136 = vunpack.c.h.b16 %v1059
    %v1137 = vunpack.c.l.b16 %v1060
    %v1138 = vunpack.c.h.b16 %v1060
    %v1139 = vunpack.c.l.b16 %v1061
    %v1140 = vunpack.c.h.b16 %v1061
    %v1141 = vunpack.c.l.b16 %v1062
    %v1142 = vunpack.c.h.b16 %v1062
    %v1143 = vunpack.c.l.b16 %v1063
    %v1144 = vunpack.c.h.b16 %v1063
    %v1145 = vunpack.c.l.b16 %v1064
    %v1146 = vunpack.c.h.b16 %v1064
    %v1147 = vunpack.c.l.b16 %v1065
    %v1148 = vunpack.c.h.b16 %v1065
    %v1149 = vunpack.c.l.b16 %v1066
    %v1150 = vunpack.c.h.b16 %v1066
    %v1151 = vunpack.c.l.b16 %v1067
    %v1152 = vunpack.c.h.b16 %v1067
    %v1153 = vunpack.c.l.b16 %v1068
    %v1154 = vunpack.c.h.b16 %v1068
    %v1155 = vunpack.c.l.b16 %v1069
    %v1156 = vunpack.c.h.b16 %v1069
    %v1157 = vunpack.c.l.b16 %v1070
    %v1158 = vunpack.c.h.b16 %v1070
    %v1159 = vunpack.c.l.b16 %v1071
    %v1160 = vunpack.c.h.b16 %v1071
    %v1161 = vunpack.c.l.b16 %v1072
    %v1162 = vunpack.c.h.b16 %v1072
    %v1163 = vunpack.c.l.b16 %v1073
    %v1164 = vunpack.c.h.b16 %v1073
    %v1165 = vunpack.c.l.b16 %v1074
    %v1166 = vunpack.c.h.b16 %v1074
    %v1167 = vunpack.c.l.b16 %v1075
    %v1168 = vunpack.c.h.b16 %v1075
    %v1169 = vunpack.c.l.b16 %v1076
    %v1170 = vunpack.c.h.b16 %v1076
    %v1171 = vunpack.c.l.b16 %v1077
    %v1172 = vunpack.c.h.b16 %v1077
    %v1173 = vunpack.c.l.b16 %v1078
    %v1174 = vunpack.c.h.b16 %v1078
    %v1175 = vpack.c.b16 %v1111, %v1111
    %v1176 = vpack.c.b16 %v1112, %v1112
    %v1177 = vpack.c.b16 %v1113, %v1113
    %v1178 = vpack.c.b16 %v1114, %v1114
    %v1179 = vpack.c.b16 %v1115, %v1115
    %v1180 = vpack.c.b16 %v1116, %v1116
    %v1181 = vpack.c.b16 %v1117, %v1117
    %v1182 = vpack.c.b16 %v1118, %v1118
    %v1183 = vpack.c.b16 %v1119, %v1119
    %v1184 = vpack.c.b16 %v1120, %v1120
    %v1185 = vpack.c.b16 %v1121, %v1121
    %v1186 = vpack.c.b16 %v1122, %v1122
    %v1187 = vpack.c.b16 %v1123, %v1123
    %v1188 = vpack.c.b16 %v1124, %v1124
    %v1189 = vpack.c.b16 %v1125, %v1125
    %v1190 = vpack.c.b16 %v1126, %v1126
    %v1191 = vpack.c.b16 %v1127, %v1127
    %v1192 = vpack.c.b16 %v1128, %v1128
    %v1193 = vpack.c.b16 %v1129, %v1129
    %v1194 = vpack.c.b16 %v1130, %v1130
    %v1195 = vpack.c.b16 %v1131, %v1131
    %v1196 = vpack.c.b16 %v1132, %v1132
    %v1197 = vpack.c.b16 %v1133, %v1133
    %v1198 = vpack.c.b16 %v1134, %v1134
    %v1199 = vpack.c.b16 %v1135, %v1135
    %v1200 = vpack.c.b16 %v1136, %v1136
    %v1201 = vpack.c.b16 %v1137, %v1137
    %v1202 = vpack.c.b16 %v1138, %v1138
    %v1203 = vpack.c.b16 %v1139, %v1139
    %v1204 = vpack.c.b16 %v1140, %v1140
    %v1205 = vpack.c.b16 %v1141, %v1141
    %v1206 = vpack.c.b16 %v1142, %v1142
    %v1207 = vpack.c.b16 %v1143, %v1143
    %v1208 = vpack.c.b16 %v1144, %v1144
    %v1209 = vpack.c.b16 %v1145, %v1145
    %v1210 = vpack.c.b16 %v1146, %v1146
    %v1211 = vpack.c.b16 %v1147, %v1147
    %v1212 = vpack.c.b16 %v1148, %v1148
    %v1213 = vpack.c.b16 %v1149, %v1149
    %v1214 = vpack.c.b16 %v1150, %v1150
    %v1215 = vpack.c.b16 %v1151, %v1151
    %v1216 = vpack.c.b16 %v1152, %v1152
    %v1217 = vpack.c.b16 %v1153, %v1153
    %v1218 = vpack.c.b16 %v1154, %v1154
    %v1219 = vpack.c.b16 %v1155, %v1155
    %v1220 = vpack.c.b16 %v1156, %v1156
    %v1221 = vpack.c.b16 %v1157, %v1157
    %v1222 = vpack.c.b16 %v1158, %v1158
    %v1223 = vpack.c.b16 %v1159, %v1159
    %v1224 = vpack.c.b16 %v1160, %v1160
    %v1225 = vpack.c.b16 %v1161, %v1161
    %v1226 = vpack.c.b16 %v1162, %v1162
    %v1227 = vpack.c.b16 %v1163, %v1163
    %v1228 = vpack.c.b16 %v1164, %v1164
    %v1229 = vpack.c.b16 %v1165, %v1165
    %v1230 = vpack.c.b16 %v1166, %v1166
    %v1231 = vpack.c.b16 %v1167, %v1167
    %v1232 = vpack.c.b16 %v1168, %v1168
    %v1233 = vpack.c.b16 %v1169, %v1169
    %v1234 = vpack.c.b16 %v1170, %v1170
    %v1235 = vpack.c.b16 %v1171, %v1171
    %v1236 = vpack.c.b16 %v1172, %v1172
    %v1237 = vpack.c.b16 %v1173, %v1173
    %v1238 = vpack.c.b16 %v1174, %v1174
    %1303 = vst [vmem:[#allocation7] sm:$0xf] %v1175
    %1304 = vst [vmem:[#allocation7 + $0x4] sm:$0xf] %v1176
    %1305 = vst [vmem:[#allocation7 + $0x8] sm:$0xf] %v1177
    %1306 = vst [vmem:[#allocation7 + $0xc] sm:$0xf] %v1178
    %1307 = vst [vmem:[#allocation7 + $0x10] sm:$0xf] %v1179
    %1308 = vst [vmem:[#allocation7 + $0x14] sm:$0xf] %v1180
    %1309 = vst [vmem:[#allocation7 + $0x18] sm:$0xf] %v1181
    %1310 = vst [vmem:[#allocation7 + $0x1c] sm:$0xf] %v1182
    %1311 = vst [vmem:[#allocation7 + $0x20] sm:$0xf] %v1183
    %1312 = vst [vmem:[#allocation7 + $0x24] sm:$0xf] %v1184
    %1313 = vst [vmem:[#allocation7 + $0x28] sm:$0xf] %v1185
    %1314 = vst [vmem:[#allocation7 + $0x2c] sm:$0xf] %v1186
    %1315 = vst [vmem:[#allocation7 + $0x30] sm:$0xf] %v1187
    %1316 = vst [vmem:[#allocation7 + $0x34] sm:$0xf] %v1188
    %1317 = vst [vmem:[#allocation7 + $0x38] sm:$0xf] %v1189
    %1318 = vst [vmem:[#allocation7 + $0x3c] sm:$0xf] %v1190
    %1319 = vst [vmem:[#allocation7 + $0x40] sm:$0xf] %v1191
    %1320 = vst [vmem:[#allocation7 + $0x44] sm:$0xf] %v1192
    %1321 = vst [vmem:[#allocation7 + $0x48] sm:$0xf] %v1193
    %1322 = vst [vmem:[#allocation7 + $0x4c] sm:$0xf] %v1194
    %1323 = vst [vmem:[#allocation7 + $0x50] sm:$0xf] %v1195
    %1324 = vst [vmem:[#allocation7 + $0x54] sm:$0xf] %v1196
    %1325 = vst [vmem:[#allocation7 + $0x58] sm:$0xf] %v1197
    %1326 = vst [vmem:[#allocation7 + $0x5c] sm:$0xf] %v1198
    %1327 = vst [vmem:[#allocation7 + $0x60] sm:$0xf] %v1199
    %1328 = vst [vmem:[#allocation7 + $0x64] sm:$0xf] %v1200
    %1329 = vst [vmem:[#allocation7 + $0x68] sm:$0xf] %v1201
    %1330 = vst [vmem:[#allocation7 + $0x6c] sm:$0xf] %v1202
    %1331 = vst [vmem:[#allocation7 + $0x70] sm:$0xf] %v1203
    %1332 = vst [vmem:[#allocation7 + $0x74] sm:$0xf] %v1204
    %1333 = vst [vmem:[#allocation7 + $0x78] sm:$0xf] %v1205
    %1334 = vst [vmem:[#allocation7 + $0x7c] sm:$0xf] %v1206
    %1335 = vst [vmem:[#allocation7 + $0x80] sm:$0xf] %v1207
    %1336 = vst [vmem:[#allocation7 + $0x84] sm:$0xf] %v1208
    %1337 = vst [vmem:[#allocation7 + $0x88] sm:$0xf] %v1209
    %1338 = vst [vmem:[#allocation7 + $0x8c] sm:$0xf] %v1210
    %1339 = vst [vmem:[#allocation7 + $0x90] sm:$0xf] %v1211
    %1340 = vst [vmem:[#allocation7 + $0x94] sm:$0xf] %v1212
    %1341 = vst [vmem:[#allocation7 + $0x98] sm:$0xf] %v1213
    %1342 = vst [vmem:[#allocation7 + $0x9c] sm:$0xf] %v1214
    %1343 = vst [vmem:[#allocation7 + $0xa0] sm:$0xf] %v1215
    %1344 = vst [vmem:[#allocation7 + $0xa4] sm:$0xf] %v1216
    %1345 = vst [vmem:[#allocation7 + $0xa8] sm:$0xf] %v1217
    %1346 = vst [vmem:[#allocation7 + $0xac] sm:$0xf] %v1218
    %1347 = vst [vmem:[#allocation7 + $0xb0] sm:$0xf] %v1219
    %1348 = vst [vmem:[#allocation7 + $0xb4] sm:$0xf] %v1220
    %1349 = vst [vmem:[#allocation7 + $0xb8] sm:$0xf] %v1221
    %1350 = vst [vmem:[#allocation7 + $0xbc] sm:$0xf] %v1222
    %1351 = vst [vmem:[#allocation7 + $0xc0] sm:$0xf] %v1223
    %1352 = vst [vmem:[#allocation7 + $0xc4] sm:$0xf] %v1224
    %1353 = vst [vmem:[#allocation7 + $0xc8] sm:$0xf] %v1225
    %1354 = vst [vmem:[#allocation7 + $0xcc] sm:$0xf] %v1226
    %1355 = vst [vmem:[#allocation7 + $0xd0] sm:$0xf] %v1227
    %1356 = vst [vmem:[#allocation7 + $0xd4] sm:$0xf] %v1228
    %1357 = vst [vmem:[#allocation7 + $0xd8] sm:$0xf] %v1229
    %1358 = vst [vmem:[#allocation7 + $0xdc] sm:$0xf] %v1230
    %1359 = vst [vmem:[#allocation7 + $0xe0] sm:$0xf] %v1231
    %1360 = vst [vmem:[#allocation7 + $0xe4] sm:$0xf] %v1232
    %1361 = vst [vmem:[#allocation7 + $0xe8] sm:$0xf] %v1233
    %1362 = vst [vmem:[#allocation7 + $0xec] sm:$0xf] %v1234
    %1363 = vst [vmem:[#allocation7 + $0xf0] sm:$0xf] %v1235
    %1364 = vst [vmem:[#allocation7 + $0xf4] sm:$0xf] %v1236
    %1365 = vst [vmem:[#allocation7 + $0xf8] sm:$0xf] %v1237
    %1366 = vst [vmem:[#allocation7 + $0xfc] sm:$0xf] %v1238
    // Predicated region
    $region22: #{tpu_custom_call.1} parent=1 // pred_check
      _
    $region23: #{tpu_custom_call.1} parent=1 // pred_check_branch
      %1368 = sbr.rel (0) target = $region25
    $region24: #{tpu_custom_call.1} parent=1 // pred_region
      %s1370 = ssub.s32 4096, 4096
      %1371 = vsyncadd [#allocation4], %s1370
      %s1372 = sshll.u32 [#allocation7], 4
      %s1373 = int_to_ptr.vmem [resolvable:$true] %s1372
      %1378 = dma.vmem_to_hbm [thread:$0]  %s1373, 4096, %s3, [#allocation4], 64, 64, 4
    $region25: #{tpu_custom_call.1} parent=1 // pred_fallthru
      _
    // Predicated region
    $region26: #{tpu_custom_call.1} parent=1 // pred_check
      _
    $region27: #{tpu_custom_call.1} parent=1 // pred_check_branch
      %1380 = sbr.rel (0) target = $region29
    $region28: #{tpu_custom_call.1} parent=1 // pred_region
      %1381 = dma.done [#allocation4], 4096
    $region29: #{tpu_custom_call.1} parent=1 // pred_fallthru
      _
    %1382 = vsyncpa [#allocation3], 1
    %1383 = vsyncpa [#allocation6], 1
    %1384 = vsyncpa [#allocation4], 1

</llo_original>
